<compile_context>
chip_gen: v6e
topology: v6e:2x2x1
jax: 0.10.0
libtpu: 0.0.40
codegen_flags: <defaults>
</compile_context>

<pallas_src>
import functools

import jax
import jax.numpy as jnp
import numpy as np
from jax.experimental import pallas as pl
from jax.experimental.pallas import tpu as pltpu

ALPHA = 0.7
BETA = 0.3
_NUM_CORES = 2          # leading "parallel" grid axis; v7x has 2 TCs, harmless elsewhere
_OUT_BLOCK = (8, 128)   # one legal VMEM tile per core for the partial-loss writeback


def _patch_score_loss_kernel(pred_ref, target_ref, out_ref, sse_acc, kl_acc,
                             *, sm_axis, scale_mse, scale_kl):
    """Batch-tiled accumulating reduction.

    sse_acc / kl_acc : VMEM f32 vectors (block reduced along `sm_axis`) holding the
                       running sum of squared diffs / per-row KL for this core.
    out_ref          : (8,128) VMEM block per core; element [0,0] receives this
                       core's alpha/beta-combined partial loss at the last step.
    """
    step = pl.program_id(1)

    @pl.when(step == 0)
    def _init():
        sse_acc[...] = jnp.zeros_like(sse_acc)
        kl_acc[...] = jnp.zeros_like(kl_acc)

    p = pred_ref[...].astype(jnp.float32)
    t = target_ref[...].astype(jnp.float32)

    # ---- MSE partial: per-row/column sums of squared differences ----
    diff = p - t
    sse_acc[...] += jnp.sum(diff * diff, axis=sm_axis, keepdims=True)

    # ---- KL(softmax(t*10) || softmax(p*10)) partial, numerically stable ----
    ps = p * 10.0
    ts = t * 10.0
    ps = ps - jnp.max(ps, axis=sm_axis, keepdims=True)
    ts = ts - jnp.max(ts, axis=sm_axis, keepdims=True)
    zp = jnp.sum(jnp.exp(ps), axis=sm_axis, keepdims=True)
    te = jnp.exp(ts)
    zt = jnp.sum(te, axis=sm_axis, keepdims=True)
    # Exact rearrangement using sum(target_dist) == 1 per row:
    #   kl_row = sum(te * (ts - ps)) / zt + log zp - log zt
    kl_acc[...] += (jnp.sum(te * (ts - ps), axis=sm_axis, keepdims=True) / zt
                    + jnp.log(zp) - jnp.log(zt))

    @pl.when(step == pl.num_programs(1) - 1)
    def _finalize():
        partial = (scale_mse * jnp.sum(sse_acc[...])
                   + scale_kl * jnp.sum(kl_acc[...]))
        row = jax.lax.broadcasted_iota(jnp.int32, _OUT_BLOCK, 0)
        col = jax.lax.broadcasted_iota(jnp.int32, _OUT_BLOCK, 1)
        out_ref[...] = jnp.where((row == 0) & (col == 0), partial, 0.0)


def _round_up(x, m):
    return ((x + m - 1) // m) * m


def _hw_budget():
    """(target per-input block bytes, scoped-VMEM limit) per TPU generation."""
    try:
        vmem_cap = int(pltpu.get_tpu_info().vmem_capacity_bytes)
    except Exception:
        vmem_cap = 0
    if vmem_cap > (64 << 20):      # v5e / v6e: 128 MiB physical VMEM per core
        return 4 << 20, 64 << 20
    return 2 << 20, 48 << 20       # v7x (64 MiB VMEM/TC) or unknown: conservative


def patch_score_loss(pred, target, batch_block=None):
    """Pallas implementation of PatchScoreLoss(alpha=0.7, beta=0.3).forward."""
    if pred.ndim == 1:
        pred = pred[None, :]
        target = target[None, :]
    if pred.ndim != 2 or pred.shape != target.shape:
        raise ValueError("expected matching 1-D or 2-D [batch, scores] inputs")
    B, N = pred.shape
    itemsize = jnp.dtype(pred.dtype).itemsize
    target_block_bytes, vmem_limit = _hw_budget()

    lane_dense = N < 128
    if lane_dense:
        # Small score dim: put the batch on the 128-lane axis so every vector op
        # is fully utilized; softmax/KL reduce over sublanes (axis 0).
        # TODO(synk): have the producer emit [N, B] directly to skip this transpose.
        pred_x, target_x = pred.T, target.T
        align = 128
        sm_axis = 0
    else:
        pred_x, target_x = pred, target
        align = 8
        sm_axis = 1

    # Batch-tile size: sized by the f32 working set (kernel upcasts internally),
    # aligned, and capped so tiny batches are not massively over-padded (each of
    # the 2 grid "cores" gets at least one block).
    if batch_block is None:
        tb = target_block_bytes // max(1, N * 4)
    else:
        tb = int(batch_block)
    tb = (tb // align) * align
    tb = min(tb, _round_up(pl.cdiv(B, _NUM_CORES), align)) if tb > 0 else align
    tb = max(tb, align)

    if tb * N * 4 > (8 << 20):
        # TODO(synk): tile N with a two-pass online-softmax for very large score dims.
        raise ValueError(f"score dim N={N} needs an N-tiled online-softmax kernel")

    nb_per_core = pl.cdiv(pl.cdiv(B, tb), _NUM_CORES)
    b_pad = _NUM_CORES * nb_per_core * tb
    if b_pad != B:
        # Zero rows/columns are exactly neutral for both the MSE and KL sums.
        pad = ((0, 0), (0, b_pad - B)) if lane_dense else ((0, b_pad - B), (0, 0))
        pred_x = jnp.pad(pred_x, pad)
        target_x = jnp.pad(target_x, pad)

    if lane_dense:
        blk = (N, tb)
        imap = lambda c, b: (0, c * nb_per_core + b)
        acc_shape = (1, tb)
    else:
        blk = (tb, N)
        imap = lambda c, b: (c * nb_per_core + b, 0)
        acc_shape = (tb, 1)

    kernel = functools.partial(
        _patch_score_loss_kernel,
        sm_axis=sm_axis,
        scale_mse=ALPHA / float(B * N),
        scale_kl=BETA / float(B),
    )

    out = pl.pallas_call(
        kernel,
        out_shape=jax.ShapeDtypeStruct(
            (_NUM_CORES * _OUT_BLOCK[0], _OUT_BLOCK[1]), jnp.float32),
        grid=(_NUM_CORES, nb_per_core),
        in_specs=[pl.BlockSpec(blk, imap), pl.BlockSpec(blk, imap)],
        out_specs=pl.BlockSpec(_OUT_BLOCK, lambda c, b: (c, 0)),
        scratch_shapes=[pltpu.VMEM(acc_shape, jnp.float32),
                        pltpu.VMEM(acc_shape, jnp.float32)],
        compiler_params=pltpu.CompilerParams(
            dimension_semantics=("parallel", "arbitrary"),
            vmem_limit_bytes=vmem_limit,
        ),
        cost_estimate=pl.CostEstimate(
            flops=12 * B * N,
            transcendentals=2 * B * N,
            bytes_accessed=2 * B * N * itemsize + _NUM_CORES * 8 * 128 * 4,
        ),
    )(pred_x, target_x)
    # Each core left its combined partial at [c*8, 0] and exact zeros elsewhere.
    return jnp.sum(out)


def _reference(pred, target):
    pred = np.asarray(pred, dtype=np.float64)
    target = np.asarray(target, dtype=np.float64)
    if pred.ndim == 1:
        pred = pred[None, :]
        target = target[None, :]
    mse = np.mean((pred - target) ** 2)

    def softmax(x):
        x = x - x.max(axis=1, keepdims=True)
        e = np.exp(x)
        return e / e.sum(axis=1, keepdims=True)

    pd = softmax(pred * 10.0)
    td = softmax(target * 10.0)
    kl = np.sum(td * (np.log(td) - np.log(pd))) / pred.shape[0]
    return ALPHA * mse + BETA * kl


if __name__ == "__main__":
    key = jax.random.PRNGKey(0)
    k1, k2, k3, k4, k5, k6 = jax.random.split(key, 6)

    # Case 1: module-like small shape (batch=2, 16 patch scores) -> lane-dense path.
    pred = jax.random.normal(k1, (2, 16), dtype=jnp.float32)
    target = jax.random.normal(k2, (2, 16), dtype=jnp.float32)
    loss = patch_score_loss(pred, target)
    jax.block_until_ready(loss)
    np.testing.assert_allclose(float(loss), _reference(pred, target),
                               rtol=2e-5, atol=2e-5)

    # Case 2: lane-dense path with multiple reduction steps per core + zero padding.
    pred2 = jax.random.normal(k3, (300, 16), dtype=jnp.float32)
    target2 = jax.random.normal(k4, (300, 16), dtype=jnp.float32)
    loss2 = patch_score_loss(pred2, target2, batch_block=128)
    jax.block_until_ready(loss2)
    np.testing.assert_allclose(float(loss2), _reference(pred2, target2),
                               rtol=2e-5, atol=2e-5)

    # Case 3: wide-N ([B, N]) path, multi-step accumulation + padding.
    pred3 = jax.random.normal(k5, (24, 128), dtype=jnp.float32)
    target3 = jax.random.normal(k6, (24, 128), dtype=jnp.float32)
    loss3 = patch_score_loss(pred3, target3, batch_block=8)
    jax.block_until_ready(loss3)
    np.testing.assert_allclose(float(loss3), _reference(pred3, target3),
                               rtol=2e-5, atol=2e-5)

    print("KERNEL_OK")
</pallas_src>

<mosaic_0001>
module attributes {stable_mosaic.version = 11 : i64} {
  func.func @_patch_score_loss_kernel(%arg0: i32, %arg1: i32, %arg2: memref<16x128xf32, #tpu.memory_space<vmem>>, %arg3: memref<16x128xf32, #tpu.memory_space<vmem>>, %arg4: memref<8x128xf32, #tpu.memory_space<vmem>>, %arg5: memref<1x128xf32, #tpu.memory_space<vmem>>, %arg6: memref<1x128xf32, #tpu.memory_space<vmem>>) attributes {dimension_semantics = [#tpu.dimension_semantics<parallel>, #tpu.dimension_semantics<arbitrary>], iteration_bounds = array<i64: 2, 1>, scalar_prefetch = 0 : i64, scratch_operands = 2 : i64, tpu.core_type = #tpu.core_type<tc>, window_params = [{transform_indices = @transform_0, window_bounds = array<i64: 16, 128>}, {transform_indices = @transform_1, window_bounds = array<i64: 16, 128>}, {transform_indices = @transform_2, window_bounds = array<i64: 8, 128>}]} {
    %c0_i32 = arith.constant 0 : i32
    %0 = arith.cmpi eq, %arg1, %c0_i32 : i32
    %1 = arith.extui %0 : i1 to i32
    %c0_i32_0 = arith.constant 0 : i32
    %2 = arith.cmpi ne, %1, %c0_i32_0 : i32
    scf.if %2 {
      %cst_21 = arith.constant 0.000000e+00 : f32
      %45 = vector.broadcast %cst_21 : f32 to vector<1x128xf32>
      %c0_22 = arith.constant 0 : index
      %c0_23 = arith.constant 0 : index
      %46 = vector.load %arg5[%c0_22, %c0_23] : memref<1x128xf32, #tpu.memory_space<vmem>>, vector<1x128xf32>
      tpu.vector_store %arg5[%c0_22, %c0_23], %45 {strides = array<i32>} : memref<1x128xf32, #tpu.memory_space<vmem>>, vector<1x128xf32>,
      %cst_24 = arith.constant 0.000000e+00 : f32
      %47 = vector.broadcast %cst_24 : f32 to vector<1x128xf32>
      %c0_25 = arith.constant 0 : index
      %c0_26 = arith.constant 0 : index
      %48 = vector.load %arg6[%c0_25, %c0_26] : memref<1x128xf32, #tpu.memory_space<vmem>>, vector<1x128xf32>
      tpu.vector_store %arg6[%c0_25, %c0_26], %47 {strides = array<i32>} : memref<1x128xf32, #tpu.memory_space<vmem>>, vector<1x128xf32>,
    } else {
    }
    %c0 = arith.constant 0 : index
    %c0_1 = arith.constant 0 : index
    %3 = vector.load %arg2[%c0, %c0_1] : memref<16x128xf32, #tpu.memory_space<vmem>>, vector<16x128xf32>
    %c0_2 = arith.constant 0 : index
    %c0_3 = arith.constant 0 : index
    %4 = vector.load %arg3[%c0_2, %c0_3] : memref<16x128xf32, #tpu.memory_space<vmem>>, vector<16x128xf32>
    %5 = arith.subf %3, %4 : vector<16x128xf32>
    %c0_4 = arith.constant 0 : index
    %c0_5 = arith.constant 0 : index
    %6 = vector.load %arg5[%c0_4, %c0_5] : memref<1x128xf32, #tpu.memory_space<vmem>>, vector<1x128xf32>
    %7 = arith.mulf %5, %5 : vector<16x128xf32>
    %cst = arith.constant dense<0.000000e+00> : vector<128xf32>
    %8 = vector.multi_reduction <add>, %7, %cst [0] : vector<16x128xf32> to vector<128xf32>
    %9 = vector.shape_cast %8 : vector<128xf32> to vector<1x128xf32>
    %10 = arith.addf %6, %9 : vector<1x128xf32>
    %c0_6 = arith.constant 0 : index
    %c0_7 = arith.constant 0 : index
    %11 = vector.load %arg5[%c0_6, %c0_7] : memref<1x128xf32, #tpu.memory_space<vmem>>, vector<1x128xf32>
    tpu.vector_store %arg5[%c0_6, %c0_7], %10 {strides = array<i32>} : memref<1x128xf32, #tpu.memory_space<vmem>>, vector<1x128xf32>,
    %cst_8 = arith.constant 1.000000e+01 : f32
    %12 = vector.broadcast %cst_8 : f32 to vector<16x128xf32>
    %13 = arith.mulf %3, %12 : vector<16x128xf32>
    %cst_9 = arith.constant 1.000000e+01 : f32
    %14 = vector.broadcast %cst_9 : f32 to vector<16x128xf32>
    %15 = arith.mulf %4, %14 : vector<16x128xf32>
    %cst_10 = arith.constant dense<0xFF800000> : vector<128xf32>
    %16 = vector.multi_reduction <maximumf>, %13, %cst_10 [0] : vector<16x128xf32> to vector<128xf32>
    %17 = vector.shape_cast %16 : vector<128xf32> to vector<1x128xf32>
    %18 = vector.broadcast %17 : vector<1x128xf32> to vector<16x128xf32>
    %19 = arith.subf %13, %18 : vector<16x128xf32>
    %cst_11 = arith.constant dense<0xFF800000> : vector<128xf32>
    %20 = vector.multi_reduction <maximumf>, %15, %cst_11 [0] : vector<16x128xf32> to vector<128xf32>
    %21 = vector.shape_cast %20 : vector<128xf32> to vector<1x128xf32>
    %22 = vector.broadcast %21 : vector<1x128xf32> to vector<16x128xf32>
    %23 = arith.subf %15, %22 : vector<16x128xf32>
    %24 = math.exp %19 : vector<16x128xf32>
    %cst_12 = arith.constant dense<0.000000e+00> : vector<128xf32>
    %25 = vector.multi_reduction <add>, %24, %cst_12 [0] : vector<16x128xf32> to vector<128xf32>
    %26 = vector.shape_cast %25 : vector<128xf32> to vector<1x128xf32>
    %27 = math.exp %23 : vector<16x128xf32>
    %cst_13 = arith.constant dense<0.000000e+00> : vector<128xf32>
    %28 = vector.multi_reduction <add>, %27, %cst_13 [0] : vector<16x128xf32> to vector<128xf32>
    %29 = vector.shape_cast %28 : vector<128xf32> to vector<1x128xf32>
    %c0_14 = arith.constant 0 : index
    %c0_15 = arith.constant 0 : index
    %30 = vector.load %arg6[%c0_14, %c0_15] : memref<1x128xf32, #tpu.memory_space<vmem>>, vector<1x128xf32>
    %31 = arith.subf %23, %19 : vector<16x128xf32>
    %32 = arith.mulf %27, %31 : vector<16x128xf32>
    %cst_16 = arith.constant dense<0.000000e+00> : vector<128xf32>
    %33 = vector.multi_reduction <add>, %32, %cst_16 [0] : vector<16x128xf32> to vector<128xf32>
    %34 = vector.shape_cast %33 : vector<128xf32> to vector<1x128xf32>
    %35 = arith.divf %34, %29 : vector<1x128xf32>
    %36 = math.log %26 : vector<1x128xf32>
    %37 = arith.addf %35, %36 : vector<1x128xf32>
    %38 = math.log %29 : vector<1x128xf32>
    %39 = arith.subf %37, %38 : vector<1x128xf32>
    %40 = arith.addf %30, %39 : vector<1x128xf32>
    %c0_17 = arith.constant 0 : index
    %c0_18 = arith.constant 0 : index
    %41 = vector.load %arg6[%c0_17, %c0_18] : memref<1x128xf32, #tpu.memory_space<vmem>>, vector<1x128xf32>
    tpu.vector_store %arg6[%c0_17, %c0_18], %40 {strides = array<i32>} : memref<1x128xf32, #tpu.memory_space<vmem>>, vector<1x128xf32>,
    %c0_i32_19 = arith.constant 0 : i32
    %42 = arith.cmpi eq, %arg1, %c0_i32_19 : i32
    %43 = arith.extui %42 : i1 to i32
    %c0_i32_20 = arith.constant 0 : i32
    %44 = arith.cmpi ne, %43, %c0_i32_20 : i32
    scf.if %44 {
      %c0_21 = arith.constant 0 : index
      %c0_22 = arith.constant 0 : index
      %45 = vector.load %arg5[%c0_21, %c0_22] : memref<1x128xf32, #tpu.memory_space<vmem>>, vector<1x128xf32>
      %46 = vector.shape_cast %45 : vector<1x128xf32> to vector<1x1x128xf32>
      %cst_23 = arith.constant dense<0.000000e+00> : vector<1xf32>
      %47 = vector.multi_reduction <add>, %46, %cst_23 [1, 2] : vector<1x1x128xf32> to vector<1xf32>
      %48 = vector.shape_cast %47 : vector<1xf32> to vector<1x1x1xf32>
      %49 = vector.extract %48[0, 0, 0] : f32 from vector<1x1x1xf32>
      %cst_24 = arith.constant 2.187500e-02 : f32
      %50 = arith.mulf %cst_24, %49 : f32
      %c0_25 = arith.constant 0 : index
      %c0_26 = arith.constant 0 : index
      %51 = vector.load %arg6[%c0_25, %c0_26] : memref<1x128xf32, #tpu.memory_space<vmem>>, vector<1x128xf32>
      %52 = vector.shape_cast %51 : vector<1x128xf32> to vector<1x1x128xf32>
      %cst_27 = arith.constant dense<0.000000e+00> : vector<1xf32>
      %53 = vector.multi_reduction <add>, %52, %cst_27 [1, 2] : vector<1x1x128xf32> to vector<1xf32>
      %54 = vector.shape_cast %53 : vector<1xf32> to vector<1x1x1xf32>
      %55 = vector.extract %54[0, 0, 0] : f32 from vector<1x1x1xf32>
      %cst_28 = arith.constant 1.500000e-01 : f32
      %56 = arith.mulf %cst_28, %55 : f32
      %57 = arith.addf %50, %56 : f32
      %58 = tpu.iota {dimensions = array<i32: 0>} : vector<8x128xi32>
      %59 = tpu.iota {dimensions = array<i32: 1>} : vector<8x128xi32>
      %c0_i32_29 = arith.constant 0 : i32
      %60 = vector.broadcast %c0_i32_29 : i32 to vector<8x128xi32>
      %61 = arith.cmpi eq, %58, %60 : vector<8x128xi32>
      %c0_i32_30 = arith.constant 0 : i32
      %62 = vector.broadcast %c0_i32_30 : i32 to vector<8x128xi32>
      %63 = arith.cmpi eq, %59, %62 : vector<8x128xi32>
      %64 = arith.andi %61, %63 : vector<8x128xi1>
      %cst_31 = arith.constant 0.000000e+00 : f32
      %65 = vector.broadcast %57 : f32 to vector<8x128xf32>
      %66 = vector.broadcast %cst_31 : f32 to vector<8x128xf32>
      %67 = arith.select %64, %65, %66 : vector<8x128xi1>, vector<8x128xf32>
      %c0_32 = arith.constant 0 : index
      %c0_33 = arith.constant 0 : index
      %68 = vector.load %arg4[%c0_32, %c0_33] : memref<8x128xf32, #tpu.memory_space<vmem>>, vector<8x128xf32>
      tpu.vector_store %arg4[%c0_32, %c0_33], %67 {strides = array<i32>} : memref<8x128xf32, #tpu.memory_space<vmem>>, vector<8x128xf32>,
    } else {
    }
    return
  }
  func.func @transform_0(%arg0: i32, %arg1: i32) -> (i32, i32) {
    %c1_i32 = arith.constant 1 : i32
    %0 = arith.muli %arg0, %c1_i32 : i32
    %1 = arith.addi %0, %arg1 : i32
    %c0_i32 = arith.constant 0 : i32
    %c0_i32_0 = arith.constant 0 : i32
    return %c0_i32, %1 : i32, i32
  }
  func.func @transform_1(%arg0: i32, %arg1: i32) -> (i32, i32) {
    %c1_i32 = arith.constant 1 : i32
    %0 = arith.muli %arg0, %c1_i32 : i32
    %1 = arith.addi %0, %arg1 : i32
    %c0_i32 = arith.constant 0 : i32
    %c0_i32_0 = arith.constant 0 : i32
    return %c0_i32, %1 : i32, i32
  }
  func.func @transform_2(%arg0: i32, %arg1: i32) -> (i32, i32) {
    %c0_i32 = arith.constant 0 : i32
    %c0_i32_0 = arith.constant 0 : i32
    return %arg0, %c0_i32 : i32, i32
  }
}

</mosaic_0001>

<llo_original>
// kernel: tpu_custom_call.1
$region0: #{tpu_custom_call.1}
  #allocation0 [shape = 'u32[]', space=smem, size = 0x4, offset = 0x4, fixed_abs, tag = 'smem constant byte address 0x4 - core index']
  #allocation1 [shape = 'u32[144,128]{1,0:T(1,128)}', space=vmem, size = 0x12000, scoped, tag = 'internal scratch']
  #allocation2 [shape = 'f32[1,128]{1,0:T(1,128)}', space=vmem, size = 0x200, scoped, tag = 'scratch operand']
  #allocation3 [shape = 'f32[1,128]{1,0:T(1,128)}', space=vmem, size = 0x200, scoped, tag = 'scratch operand']
  %s0 = inlined_call_operand.hbm [shape: f32[16,256], index: 0, kind: input, shape index: {}]
  %s1 = inlined_call_operand.hbm [shape: f32[16,256], index: 1, kind: input, shape index: {}]
  %s2 = inlined_call_operand.hbm [shape: f32[16,128], index: 2, kind: output, shape index: {}]
  %s3 = sld [smem:[#allocation0]]
  $region57: #{tpu_custom_call.1} parent=0
    _
  %s5 = ssub.s32 1, %s3
  %s6 = scalar_select 0, %s5, %s3
  $region1: #{tpu_custom_call.1} parent=0
    #allocation4 [shape = 'u8[16384]{0}', space=vmem, size = 0x4000, scoped, tag = 'input window, operand 0']
    #allocation5 [shape = 's32[2]{0}', space=sflag, size = 0x8, scoped, tag = 'scoped memory for tpu_custom_call.1']
    #allocation6 [shape = 's32[2]{0}', space=sflag, size = 0x8, scoped, tag = 'scoped memory for tpu_custom_call.1']
    #allocation7 [shape = 'u8[16384]{0}', space=vmem, size = 0x4000, scoped, tag = 'input window, operand 1']
    #allocation8 [shape = 's32[2]{0}', space=sflag, size = 0x8, scoped, tag = 'scoped memory for tpu_custom_call.1']
    #allocation9 [shape = 'u8[8192]{0}', space=vmem, size = 0x2000, scoped, tag = 'output window, operand 0']
    %7 = vsyncpa [#allocation5], 0
    %s8 = scalar_lea.sflag [#allocation5], 1
    %9 = vsyncpa %s8, 0
    %10 = vsyncpa [#allocation8], 0
    %s11 = scalar_lea.sflag [#allocation8], 1
    %12 = vsyncpa %s11, 0
    %13 = vsyncpa [#allocation6], 0
    %s14 = scalar_lea.sflag [#allocation6], 1
    %15 = vsyncpa %s14, 0
    loop: start=0, step=1, limit=4
    $region2: #{tpu_custom_call.1} parent=1 // loop_pre_header
      _
    $region3: #{tpu_custom_call.1} parent=1 // loop_header
      %s17 = sphi 0, %s21
      %p18 = scmp.ge.s32.totalorder %s17, 4
      %s24 = sphi 0, %s36
      %s25 = sphi 0, %s32
      %s26 = sphi 0, %s24
      %s27 = sphi 0, %s25
      %s28 = sphi 0, %s26
      %s29 = sphi 0, %s27
      %s41 = sphi 0, %s43
      %s44 = sphi 0, %s41
      %s45 = sphi 0, %s44
      %s61 = sphi 0, %s45
      %s69 = sphi 0, %s71
      %s72 = sphi 0, %s69
      %s73 = sphi 0, %s72
      %s89 = sphi 0, %s73
      %s95 = sphi 0, %s97
      %s98 = sphi 0, %s95
      %s99 = sphi 0, %s98
      %s115 = sphi 0, %s99
    $region4: #{tpu_custom_call.1} parent=1 // loop_header_branch
      %20 = sbr.rel (%p18) target = $region8
    $region5: #{tpu_custom_call.1} parent=1 // loop_body
      %s22 = ssub.s32 %s17, 1
      %s23 = ssub.s32 %s17, 2
      %s30 = sadd.s32 1, %s25
      %p31 = scmp.ge.s32.totalorder %s30, 1
      %s32 = scalar_select %p31, 0, %s30
      %s33 = sadd.s32 1, %s24
      %s34 = scalar_select %p31, %s33, %s24
      %p35 = scmp.ge.s32.totalorder %s34, 2
      %s36 = scalar_select %p35, 0, %s34
      %s37 = sadd.s32 %s24, %s25
      %s38 = sadd.s32 %s36, %s32
      %s39 = ssub.s32 %s37, %s38
      %p40 = scmp.eq.s32.totalorder %s39, 0
      %s42 = sadd.s32 %s41, 1
      %s43 = scalar_select %p40, %s41, %s42
      %p46 = pneg %p40
      %p47 = scmp.eq.s32.totalorder %s17, 1
      %p48 = por %p46, %p47
      %p49 = scmp.ne.s32.totalorder %s41, %s44
      %p50 = scmp.eq.s32.totalorder %s17, 0
      %p51 = por %p49, %p50
      %p52 = scmp.ne.s32.totalorder %s41, %s44
      %p53 = scmp.eq.s32.totalorder %s22, 1
      %p54 = por %p52, %p53
      %p55 = scmp.ne.s32.totalorder %s44, %s45
      %p56 = scmp.eq.s32.totalorder %s22, 0
      %p57 = por %p55, %p56
      %p58 = scmp.ne.s32.totalorder %s44, %s45
      %p59 = scmp.eq.s32.totalorder %s23, 1
      %p60 = por %p58, %p59
      %p62 = scmp.ne.s32.totalorder %s45, %s61
      %p63 = scmp.eq.s32.totalorder %s23, 0
      %p64 = por %p62, %p63
      %s65 = sadd.s32 %s24, %s25
      %s66 = sadd.s32 %s36, %s32
      %s67 = ssub.s32 %s65, %s66
      %p68 = scmp.eq.s32.totalorder %s67, 0
      %s70 = sadd.s32 %s69, 1
      %s71 = scalar_select %p68, %s69, %s70
      %p74 = pneg %p68
      %p75 = scmp.eq.s32.totalorder %s17, 1
      %p76 = por %p74, %p75
      %p77 = scmp.ne.s32.totalorder %s69, %s72
      %p78 = scmp.eq.s32.totalorder %s17, 0
      %p79 = por %p77, %p78
      %p80 = scmp.ne.s32.totalorder %s69, %s72
      %p81 = scmp.eq.s32.totalorder %s22, 1
      %p82 = por %p80, %p81
      %p83 = scmp.ne.s32.totalorder %s72, %s73
      %p84 = scmp.eq.s32.totalorder %s22, 0
      %p85 = por %p83, %p84
      %p86 = scmp.ne.s32.totalorder %s72, %s73
      %p87 = scmp.eq.s32.totalorder %s23, 1
      %p88 = por %p86, %p87
      %p90 = scmp.ne.s32.totalorder %s73, %s89
      %p91 = scmp.eq.s32.totalorder %s23, 0
      %p92 = por %p90, %p91
      %s93 = ssub.s32 %s24, %s36
      %p94 = scmp.eq.s32.totalorder %s93, 0
      %s96 = sadd.s32 %s95, 1
      %s97 = scalar_select %p94, %s95, %s96
      %p100 = pneg %p94
      %p101 = scmp.eq.s32.totalorder %s17, 1
      %p102 = por %p100, %p101
      %p103 = scmp.ne.s32.totalorder %s95, %s98
      %p104 = scmp.eq.s32.totalorder %s17, 0
      %p105 = por %p103, %p104
      %p106 = scmp.ne.s32.totalorder %s95, %s98
      %p107 = scmp.eq.s32.totalorder %s22, 1
      %p108 = por %p106, %p107
      %p109 = scmp.ne.s32.totalorder %s98, %s99
      %p110 = scmp.eq.s32.totalorder %s22, 0
      %p111 = por %p109, %p110
      %p112 = scmp.ne.s32.totalorder %s98, %s99
      %p113 = scmp.eq.s32.totalorder %s23, 1
      %p114 = por %p112, %p113
      %p116 = scmp.ne.s32.totalorder %s99, %s115
      %p117 = scmp.eq.s32.totalorder %s23, 0
      %p118 = por %p116, %p117
      %p119 = scmp.le.s32.totalorder 1, %s17
      %p120 = scmp.lt.s32.totalorder %s17, 3
      %p121 = pnand %p119, %p120
      %p122 = pneg %p121
      // Predicated region
      $region9: #{tpu_custom_call.1} parent=5 // pred_check
        _
      $region10: #{tpu_custom_call.1} parent=5 // pred_check_branch
        %124 = sbr.rel (%p121) target = $region12
      $region11: #{tpu_custom_call.1} parent=5 // pred_region
        %s125 = ssub.s32 %s17, 1
      $region12: #{tpu_custom_call.1} parent=5 // pred_fallthru
        _
      %p126 = scmp.lt.s32.totalorder %s17, 2
      // Predicated region
      $region13: #{tpu_custom_call.1} parent=5 // pred_check
        %p127 = pneg %p126
      $region14: #{tpu_custom_call.1} parent=5 // pred_check_branch
        %129 = sbr.rel (%p127) target = $region16
      $region15: #{tpu_custom_call.1} parent=5 // pred_region
        // Predicated region
        $region17: #{tpu_custom_call.1} parent=15 // pred_check
          %p130 = pneg %p51
        $region18: #{tpu_custom_call.1} parent=15 // pred_check_branch
          %132 = sbr.rel (%p130) target = $region20
        $region19: #{tpu_custom_call.1} parent=15 // pred_region
          %s133 = sand.u32 %s41, 1
          %s134 = scalar_lea.sflag [#allocation5], %s133
          %s135 = sand.u32 %s41, 1
          %s136 = smul.addr %s135, 16
          %s137 = scalar_lea.vmem [#allocation4], %s136
          %s138 = sadd.s32 %s24, %s25
          %s140 = ssub.s32 256, 256
          %141 = vsyncadd %s134, %s140
          %s142 = smul.addr %s138, 128
          %s143 = scalar_lea.hbm %s0, %s142
          %s144 = sshll.u32 %s137, 4
          %s145 = int_to_ptr.vmem [resolvable:$true] %s144
          %150 = dma.hbm_to_vmem [thread:$0]  %s143, 256, %s145, %s134, 256, 128, 8
        $region20: #{tpu_custom_call.1} parent=15 // pred_fallthru
          _
        // Predicated region
        $region21: #{tpu_custom_call.1} parent=15 // pred_check
          %p151 = pneg %p79
        $region22: #{tpu_custom_call.1} parent=15 // pred_check_branch
          %153 = sbr.rel (%p151) target = $region24
        $region23: #{tpu_custom_call.1} parent=15 // pred_region
          %s154 = sand.u32 %s69, 1
          %s155 = scalar_lea.sflag [#allocation8], %s154
          %s156 = sand.u32 %s69, 1
          %s157 = smul.addr %s156, 16
          %s158 = scalar_lea.vmem [#allocation7], %s157
          %s159 = sadd.s32 %s24, %s25
          %s161 = ssub.s32 256, 256
          %162 = vsyncadd %s155, %s161
          %s163 = smul.addr %s159, 128
          %s164 = scalar_lea.hbm %s1, %s163
          %s165 = sshll.u32 %s158, 4
          %s166 = int_to_ptr.vmem [resolvable:$true] %s165
          %171 = dma.hbm_to_vmem [thread:$0]  %s164, 256, %s166, %s155, 256, 128, 8
        $region24: #{tpu_custom_call.1} parent=15 // pred_fallthru
          _
      $region16: #{tpu_custom_call.1} parent=5 // pred_fallthru
        _
      %p172 = scmp.le.s32.totalorder 1, %s17
      %p173 = scmp.lt.s32.totalorder %s17, 3
      %p174 = pnand %p172, %p173
      %p175 = pneg %p174
      // Predicated region
      $region25: #{tpu_custom_call.1} parent=5 // pred_check
        _
      $region26: #{tpu_custom_call.1} parent=5 // pred_check_branch
        %177 = sbr.rel (%p174) target = $region28
      $region27: #{tpu_custom_call.1} parent=5 // pred_region
        %s178 = ssub.s32 %s17, 1
        %s179 = sand.u32 %s44, 1
        %s180 = scalar_lea.sflag [#allocation5], %s179
        %s181 = sand.u32 %s44, 1
        %s182 = smul.addr %s181, 16
        %s183 = scalar_lea.vmem [#allocation4], %s182
        // Predicated region
        $region29: #{tpu_custom_call.1} parent=27 // pred_check
          %p184 = pneg %p57
        $region30: #{tpu_custom_call.1} parent=27 // pred_check_branch
          %186 = sbr.rel (%p184) target = $region32
        $region31: #{tpu_custom_call.1} parent=27 // pred_region
          %187 = dma.done %s180, 256
        $region32: #{tpu_custom_call.1} parent=27 // pred_fallthru
          _
        %s188 = sand.u32 %s72, 1
        %s189 = scalar_lea.sflag [#allocation8], %s188
        %s190 = sand.u32 %s72, 1
        %s191 = smul.addr %s190, 16
        %s192 = scalar_lea.vmem [#allocation7], %s191
        // Predicated region
        $region33: #{tpu_custom_call.1} parent=27 // pred_check
          %p193 = pneg %p85
        $region34: #{tpu_custom_call.1} parent=27 // pred_check_branch
          %195 = sbr.rel (%p193) target = $region36
        $region35: #{tpu_custom_call.1} parent=27 // pred_region
          %196 = dma.done %s189, 256
        $region36: #{tpu_custom_call.1} parent=27 // pred_fallthru
          _
        %s197 = sand.u32 %s44, 1
        %s198 = scalar_lea.sflag [#allocation5], %s197
        %s199 = sand.u32 %s44, 1
        %s200 = smul.addr %s199, 16
        %s201 = scalar_lea.vmem [#allocation4], %s200
        %p202 = pneg %p57
        %p203 = pneg %p54
        %s204 = sand.u32 %s72, 1
        %s205 = scalar_lea.sflag [#allocation8], %s204
        %s206 = sand.u32 %s72, 1
        %s207 = smul.addr %s206, 16
        %s208 = scalar_lea.vmem [#allocation7], %s207
        %p209 = pneg %p85
        %p210 = pneg %p82
        %p211 = pneg %p111
        %p212 = pneg %p108
        %s213 = sand.u32 %s98, 1
        %s214 = scalar_lea.sflag [#allocation6], %s213
        %s215 = sand.u32 %s98, 1
        %s216 = smul.addr %s215, 8
        %s217 = scalar_lea.vmem [#allocation9], %s216
        %s218 = sadd.s32 %s26, %s27
        %s219 = sadd.s32 %s26, %s27
        %p220 = scmp.eq.s32.totalorder %s27, 0
        // Predicated region
        $region37: #{tpu_custom_call.1} parent=27 // pred_check
          %p221 = pneg %p220
        $region38: #{tpu_custom_call.1} parent=27 // pred_check_branch
          %223 = sbr.rel (%p221) target = $region40
        $region39: #{tpu_custom_call.1} parent=27 // pred_region
          %224 = vst [vmem:[#allocation2] sm:$0x1] 0.0
          %225 = vst [vmem:[#allocation3] sm:$0x1] 0.0
        $region40: #{tpu_custom_call.1} parent=27 // pred_fallthru
          _
        %v226 = vld [vmem:[%s183] sm:$0xff]
        %v227 = vld [vmem:[%s183 + $0x8] sm:$0xff]
        %v228 = vld [vmem:[%s192] sm:$0xff]
        %v229 = vld [vmem:[%s192 + $0x8] sm:$0xff]
        %v230 = vsub.f32 %v226, %v228
        %v231 = vsub.f32 %v227, %v229
        %v232 = vld [vmem:[#allocation2] sm:$0x1]
        %v233 = vmul.f32 %v230, %v230
        %v234 = vmul.f32 %v231, %v231
        %v235 = vadd.f32 %v233, %v234
        %v236 = vrot.slane %v235, 4
        %v237 = vadd.f32 %v235, %v236
        %v238 = vrot.slane %v237, 2
        %v239 = vadd.f32 %v237, %v238
        %v240 = vrot.slane %v239, 1
        %v241 = vadd.f32 %v239, %v240
        %v242 = vadd.f32 %v232, %v241
        %243 = vst [vmem:[#allocation2] sm:$0x1] %v242
        %v244 = vmul.f32 %v226, 10.0
        %v245 = vmul.f32 %v227, 10.0
        %v246 = vmul.f32 %v228, 10.0
        %v247 = vmul.f32 %v229, 10.0
        %v248 = vmax.f32 %v244, %v245
        %v249 = vrot.slane %v248, 4
        %v250 = vmax.f32 %v248, %v249
        %v251 = vrot.slane %v250, 2
        %v252 = vmax.f32 %v250, %v251
        %v253 = vrot.slane %v252, 1
        %v254 = vmax.f32 %v252, %v253
        %v255 = vsub.f32 %v244, %v254
        %v256 = vsub.f32 %v245, %v254
        %v257 = vmax.f32 %v246, %v247
        %v258 = vrot.slane %v257, 4
        %v259 = vmax.f32 %v257, %v258
        %v260 = vrot.slane %v259, 2
        %v261 = vmax.f32 %v259, %v260
        %v262 = vrot.slane %v261, 1
        %v263 = vmax.f32 %v261, %v262
        %v264 = vsub.f32 %v246, %v263
        %v265 = vsub.f32 %v247, %v263
        %v266 = vmul.f32 %v255, 1.442695
        %v267 = vpow.pop %v266
        %v268 = vmul.f32 %v256, 1.442695
        %v269 = vpow.pop %v268
        %v270 = vadd.f32 %v267, %v269
        %v271 = vrot.slane %v270, 4
        %v272 = vadd.f32 %v270, %v271
        %v273 = vrot.slane %v272, 2
        %v274 = vadd.f32 %v272, %v273
        %v275 = vrot.slane %v274, 1
        %v276 = vadd.f32 %v274, %v275
        %v277 = vmul.f32 %v264, 1.442695
        %v278 = vpow.pop %v277
        %v279 = vmul.f32 %v265, 1.442695
        %v280 = vpow.pop %v279
        %v281 = vadd.f32 %v278, %v280
        %v282 = vrot.slane %v281, 4
        %v283 = vadd.f32 %v281, %v282
        %v284 = vrot.slane %v283, 2
        %v285 = vadd.f32 %v283, %v284
        %v286 = vrot.slane %v285, 1
        %v287 = vadd.f32 %v285, %v286
        %v288 = vld [vmem:[#allocation3] sm:$0x1]
        %v289 = vsub.f32 %v264, %v255
        %v290 = vsub.f32 %v265, %v256
        %v291 = vmul.f32 %v278, %v289
        %v292 = vmul.f32 %v280, %v290
        %v293 = vadd.f32 %v291, %v292
        %v294 = vrot.slane %v293, 4
        %v295 = vadd.f32 %v293, %v294
        %v296 = vrot.slane %v295, 2
        %v297 = vadd.f32 %v295, %v296
        %v298 = vrot.slane %v297, 1
        %v299 = vadd.f32 %v297, %v298
        %v300 = vrcp.pop %v287
        %v301 = vmul.f32 %v299, %v300
        %v302 = vlog2.pop %v276
        %v303 = vmul.f32 %v302, 0.6931472
        %v304 = vadd.f32 %v301, %v303
        %v305 = vlog2.pop %v287
        %v306 = vmul.f32 %v305, 0.6931472
        %v307 = vsub.f32 %v304, %v306
        %v308 = vadd.f32 %v288, %v307
        %309 = vst [vmem:[#allocation3] sm:$0x1] %v308
        // Predicated region
        $region41: #{tpu_custom_call.1} parent=27 // pred_check
          %p310 = pneg %p220
        $region42: #{tpu_custom_call.1} parent=27 // pred_check_branch
          %312 = sbr.rel (%p310) target = $region44
        $region43: #{tpu_custom_call.1} parent=27 // pred_region
          %v313 = vld [vmem:[#allocation2] sm:$0x1]
          %vm314 = vcmask 1040384
          %v315 = vsel %vm314, %v313, 0.0
          %316 = vadd.xlane.f32.xlu0 %v315
          %v317 = vpop.xlane.xlu0 %316
          %v318 = vrot.slane %v317, 4
          %v319 = vadd.f32 %v317, %v318
          %v320 = vrot.slane %v319, 2
          %v321 = vadd.f32 %v319, %v320
          %v322 = vrot.slane %v321, 1
          %v323 = vadd.f32 %v321, %v322
          %s324 = vtos %v323
          %s325 = smul.f32 %s324, 0.021875
          %v326 = vld [vmem:[#allocation3] sm:$0x1]
          %v327 = vsel %vm314, %v326, 0.0
          %328 = vadd.xlane.f32.xlu0 %v327
          %v329 = vpop.xlane.xlu0 %328
          %v330 = vrot.slane %v329, 4
          %v331 = vadd.f32 %v329, %v330
          %v332 = vrot.slane %v331, 2
          %v333 = vadd.f32 %v331, %v332
          %v334 = vrot.slane %v333, 1
          %v335 = vadd.f32 %v333, %v334
          %s336 = vtos %v335
          %s337 = smul.f32 %s336, 0.15
          %s338 = sadd.f32 %s325, %s337
          %v339 = vlaneseq
          %v340 = vshrl.u32 %v339, 7
          %v341 = vlaneseq
          %v342 = vand.u32 %v341, 127
          %vm343 = vcmp.eq.s32.totalorder %v340, 0
          %vm344 = vcmp.eq.s32.totalorder %v342, 0
          %vm345 = vmand %vm343, %vm344
          %v346 = vstv %s338
          %v347 = vsel %vm345, %v346, 0.0
          %348 = vst [vmem:[%s217] sm:$0xff] %v347
        $region44: #{tpu_custom_call.1} parent=27 // pred_fallthru
          _
        %s349 = sand.u32 %s98, 1
        %s350 = scalar_lea.sflag [#allocation6], %s349
        %s351 = sand.u32 %s98, 1
        %s352 = smul.addr %s351, 8
        %s353 = scalar_lea.vmem [#allocation9], %s352
        // Predicated region
        $region45: #{tpu_custom_call.1} parent=27 // pred_check
          %p354 = pneg %p108
        $region46: #{tpu_custom_call.1} parent=27 // pred_check_branch
          %356 = sbr.rel (%p354) target = $region48
        $region47: #{tpu_custom_call.1} parent=27 // pred_region
          %s358 = ssub.s32 128, 128
          %359 = vsyncadd %s350, %s358
          %s360 = smul.addr %s26, 128
          %s361 = scalar_lea.hbm %s2, %s360
          %s363 = sshll.u32 %s353, 4
          %s364 = int_to_ptr.vmem [resolvable:$true] %s363
          %366 = dma.vmem_to_hbm [thread:$0]  %s364, 128, %s361, %s350
        $region48: #{tpu_custom_call.1} parent=27 // pred_fallthru
          _
      $region28: #{tpu_custom_call.1} parent=5 // pred_fallthru
        _
      %p367 = scmp.le.s32.totalorder 2, %s17
      // Predicated region
      $region49: #{tpu_custom_call.1} parent=5 // pred_check
        %p368 = pneg %p367
      $region50: #{tpu_custom_call.1} parent=5 // pred_check_branch
        %370 = sbr.rel (%p368) target = $region52
      $region51: #{tpu_custom_call.1} parent=5 // pred_region
        %s371 = ssub.s32 %s17, 2
        // Predicated region
        $region53: #{tpu_custom_call.1} parent=51 // pred_check
          %p372 = pneg %p114
        $region54: #{tpu_custom_call.1} parent=51 // pred_check_branch
          %374 = sbr.rel (%p372) target = $region56
        $region55: #{tpu_custom_call.1} parent=51 // pred_region
          %s375 = sand.u32 %s99, 1
          %s376 = scalar_lea.sflag [#allocation6], %s375
          %s377 = sand.u32 %s99, 1
          %s378 = smul.addr %s377, 8
          %s379 = scalar_lea.vmem [#allocation9], %s378
          %380 = dma.done %s376, 128
        $region56: #{tpu_custom_call.1} parent=51 // pred_fallthru
          _
      $region52: #{tpu_custom_call.1} parent=5 // pred_fallthru
        _
    $region6: #{tpu_custom_call.1} parent=1 // loop_footer
      %s21 = sadd.s32 1, %s17
    $region7: #{tpu_custom_call.1} parent=1 // loop_footer_branch
      %16 = sbr.rel target = $region3
    $region8: #{tpu_custom_call.1} parent=1 // loop_exit
      _
    %381 = vsyncpa [#allocation5], 1
    %s382 = scalar_lea.sflag [#allocation5], 1
    %383 = vsyncpa %s382, 1
    %384 = vsyncpa [#allocation8], 1
    %s385 = scalar_lea.sflag [#allocation8], 1
    %386 = vsyncpa %s385, 1
    %387 = vsyncpa [#allocation6], 1
    %s388 = scalar_lea.sflag [#allocation6], 1
    %389 = vsyncpa %s388, 1

</llo_original>
